<compile_context>
chip_gen: v7x
topology: tpu7x:2x2x1
jax: 0.10.0
libtpu: 0.0.40
codegen_flags: <defaults>
</compile_context>

<pallas_src>
import jax
import jax.numpy as jnp
from jax.experimental import pallas as pl
from jax.experimental.pallas import tpu as pltpu

FACTOR = 100.0
INV_FACTOR = 1.0 / FACTOR


def autoencoder_kernel(x_ref, we_ref, be_ref, wd_ref, bd_ref,
                       res_ref, enc_ref, dis_ref):
    # x_ref:  [TB, D] bf16   we_ref: [D, L] bf16   be_ref: [1, L] f32
    # wd_ref: [L, D] bf16    bd_ref: [1, D] f32
    x = x_ref[...]

    # ---- encoder: Linear + ReLU (bf16 MXU inputs, f32 accumulate) ----
    enc = jnp.dot(x, we_ref[...], preferred_element_type=jnp.float32)
    enc = jnp.maximum(enc + be_ref[...], 0.0)          # f32

    # ---- distribution_fn: straight-through ceil quantization (f32) ----
    # x_1 = a*F ; x_3 = x_1 + (ceil(x_1) - x_1) = ceil(x_1) ; dis = x_3 / F
    dis = jnp.ceil(enc * FACTOR) * INV_FACTOR           # f32 (multiply, no divide)

    # ---- decoder: Linear (bf16 MXU inputs, f32 accumulate) ----
    res = jnp.dot(dis.astype(wd_ref.dtype), wd_ref[...],
                  preferred_element_type=jnp.float32) + bd_ref[...]

    res_ref[...] = res
    enc_ref[...] = enc
    dis_ref[...] = dis


def _round_up(n, m):
    return ((n + m - 1) // m) * m


def autoencoder_forward(x_nchw, we, be, wd, bd, *, tb=None):
    B = x_nchw.shape[0]
    D, L = we.shape
    x2 = x_nchw.reshape(B, D).astype(jnp.float32)

    # Batch tile: multiple of 16 (bf16 sublane packing); 128+ rows per tile at
    # realistic batch sizes to keep the MXU M-dimension busy.
    if tb is None:
        tb = 128 if B >= 128 else _round_up(B, 16)
    Bp = _round_up(B, tb)
    if Bp != B:
        x2 = jnp.pad(x2, ((0, Bp - B), (0, 0)))

    # bf16 matmul operands (halves weight DMA, ~2-4x MXU rate); f32 biases.
    x_bf = x2.astype(jnp.bfloat16)
    we_bf = we.astype(jnp.bfloat16)
    wd_bf = wd.astype(jnp.bfloat16)
    be32 = be.reshape(1, L).astype(jnp.float32)
    bd32 = bd.reshape(1, D).astype(jnp.float32)

    grid = (Bp // tb,)

    res, enc, dis = pl.pallas_call(
        autoencoder_kernel,
        out_shape=(
            jax.ShapeDtypeStruct((Bp, D), jnp.float32),  # res (flattened)
            jax.ShapeDtypeStruct((Bp, L), jnp.float32),  # out (encoder output)
            jax.ShapeDtypeStruct((Bp, L), jnp.float32),  # dis (quantized)
        ),
        grid=grid,
        in_specs=[
            pl.BlockSpec((tb, D), lambda i: (i, 0)),   # x: tiled over batch
            pl.BlockSpec((D, L), lambda i: (0, 0)),    # we: resident
            pl.BlockSpec((1, L), lambda i: (0, 0)),    # be: resident
            pl.BlockSpec((L, D), lambda i: (0, 0)),    # wd: resident
            pl.BlockSpec((1, D), lambda i: (0, 0)),    # bd: resident
        ],
        out_specs=[
            pl.BlockSpec((tb, D), lambda i: (i, 0)),
            pl.BlockSpec((tb, L), lambda i: (i, 0)),
            pl.BlockSpec((tb, L), lambda i: (i, 0)),
        ],
        compiler_params=pltpu.CompilerParams(
            dimension_semantics=("parallel",)),        # megacore on v7x
    )(x_bf, we_bf, be32, wd_bf, bd32)

    # Drop batch padding, restore NCHW for the reconstruction.
    res = res[:B].reshape(x_nchw.shape)
    return res, enc[:B], dis[:B]


def reference_forward(x_nchw, we, be, wd, bd):
    """Same math path (bf16 matmul inputs, f32 accumulation) in plain XLA."""
    B = x_nchw.shape[0]
    D, L = we.shape
    x2 = x_nchw.reshape(B, D).astype(jnp.bfloat16)
    enc = jnp.dot(x2, we.astype(jnp.bfloat16),
                  preferred_element_type=jnp.float32)
    enc = jnp.maximum(enc + be.reshape(1, L).astype(jnp.float32), 0.0)
    dis = jnp.ceil(enc * FACTOR) * INV_FACTOR
    res = jnp.dot(dis.astype(jnp.bfloat16), wd.astype(jnp.bfloat16),
                  preferred_element_type=jnp.float32)
    res = res + bd.reshape(1, D).astype(jnp.float32)
    return res.reshape(x_nchw.shape), enc, dis


if __name__ == "__main__":
    key = jax.random.PRNGKey(0)
    kx, kwe, kbe, kwd, kbd = jax.random.split(key, 5)

    B, C, H, W = 2, 4, 16, 16
    D = C * H * W          # 1024
    L = 128                # latent width (lane-dense)

    x = jax.random.normal(kx, (B, C, H, W), dtype=jnp.float32)
    we = jax.random.normal(kwe, (D, L), dtype=jnp.float32) * (1.0 / jnp.sqrt(D))
    be = jax.random.normal(kbe, (1, L), dtype=jnp.float32) * 0.01
    wd = jax.random.normal(kwd, (L, D), dtype=jnp.float32) * (1.0 / jnp.sqrt(L))
    bd = jax.random.normal(kbd, (1, D), dtype=jnp.float32) * 0.01

    res, out, dis = jax.block_until_ready(autoencoder_forward(x, we, be, wd, bd))

    res_r, out_r, dis_r = reference_forward(x, we, be, wd, bd)
    assert res.shape == (B, C, H, W) and out.shape == (B, L) and dis.shape == (B, L)

    # Tolerances: MXU vs XLA f32-accumulation order differs by ~1e-6; ceil()
    # is discontinuous so a value sitting on an integer boundary of enc*100
    # may flip one 0.01 bucket — allow one bucket on dis and its propagation
    # through the decoder on res.
    assert jnp.allclose(out, out_r, atol=5e-3, rtol=1e-3)
    assert jnp.allclose(dis, dis_r, atol=1.5e-2, rtol=0.0)
    assert jnp.allclose(res, res_r, atol=3e-2, rtol=1e-2)

    print("KERNEL_OK")
</pallas_src>

<mosaic_0001>
module attributes {stable_mosaic.version = 11 : i64} {
  func.func @autoencoder_kernel(%arg0: i32, %arg1: memref<16x1024xbf16, #tpu.memory_space<vmem>>, %arg2: memref<1024x128xbf16, #tpu.memory_space<vmem>>, %arg3: memref<1x128xf32, #tpu.memory_space<vmem>>, %arg4: memref<128x1024xbf16, #tpu.memory_space<vmem>>, %arg5: memref<1x1024xf32, #tpu.memory_space<vmem>>, %arg6: memref<16x1024xf32, #tpu.memory_space<vmem>>, %arg7: memref<16x128xf32, #tpu.memory_space<vmem>>, %arg8: memref<16x128xf32, #tpu.memory_space<vmem>>) attributes {dimension_semantics = [#tpu.dimension_semantics<parallel>], iteration_bounds = array<i64: 1>, scalar_prefetch = 0 : i64, scratch_operands = 0 : i64, tpu.core_type = #tpu.core_type<tc>, window_params = [{transform_indices = @transform_0, window_bounds = array<i64: 16, 1024>}, {pipeline_mode = #tpu.pipeline_mode<synchronous>, transform_indices = @transform_1, window_bounds = array<i64: 1024, 128>}, {pipeline_mode = #tpu.pipeline_mode<synchronous>, transform_indices = @transform_2, window_bounds = array<i64: 1, 128>}, {pipeline_mode = #tpu.pipeline_mode<synchronous>, transform_indices = @transform_3, window_bounds = array<i64: 128, 1024>}, {pipeline_mode = #tpu.pipeline_mode<synchronous>, transform_indices = @transform_4, window_bounds = array<i64: 1, 1024>}, {transform_indices = @transform_5, window_bounds = array<i64: 16, 1024>}, {transform_indices = @transform_6, window_bounds = array<i64: 16, 128>}, {transform_indices = @transform_7, window_bounds = array<i64: 16, 128>}]} {
    %c0 = arith.constant 0 : index
    %c0_0 = arith.constant 0 : index
    %0 = vector.load %arg1[%c0, %c0_0] : memref<16x1024xbf16, #tpu.memory_space<vmem>>, vector<16x1024xbf16>
    %c0_1 = arith.constant 0 : index
    %c0_2 = arith.constant 0 : index
    %1 = vector.load %arg2[%c0_1, %c0_2] : memref<1024x128xbf16, #tpu.memory_space<vmem>>, vector<1024x128xbf16>
    %cst = arith.constant dense<0.000000e+00> : vector<16x128xf32>
    %2 = tpu.matmul %0, %1, %cst {dimension_numbers = #tpu.dot_dimension_numbers<[1], [0], [0], [1], [0, 0, 1, 1], [], []>} : vector<16x1024xbf16>, vector<1024x128xbf16>, vector<16x128xf32> -> vector<16x128xf32>
    %c0_3 = arith.constant 0 : index
    %c0_4 = arith.constant 0 : index
    %3 = vector.load %arg3[%c0_3, %c0_4] : memref<1x128xf32, #tpu.memory_space<vmem>>, vector<1x128xf32>
    %4 = vector.broadcast %3 : vector<1x128xf32> to vector<16x128xf32>
    %5 = arith.addf %2, %4 : vector<16x128xf32>
    %cst_5 = arith.constant 0.000000e+00 : f32
    %6 = vector.broadcast %cst_5 : f32 to vector<16x128xf32>
    %7 = arith.maximumf %5, %6 : vector<16x128xf32>
    %cst_6 = arith.constant 1.000000e+02 : f32
    %8 = vector.broadcast %cst_6 : f32 to vector<16x128xf32>
    %9 = arith.mulf %7, %8 : vector<16x128xf32>
    %10 = math.ceil %9 : vector<16x128xf32>
    %cst_7 = arith.constant 0.00999999977 : f32
    %11 = vector.broadcast %cst_7 : f32 to vector<16x128xf32>
    %12 = arith.mulf %10, %11 : vector<16x128xf32>
    %13 = arith.truncf %12 : vector<16x128xf32> to vector<16x128xbf16>
    %c0_8 = arith.constant 0 : index
    %c0_9 = arith.constant 0 : index
    %14 = vector.load %arg4[%c0_8, %c0_9] : memref<128x1024xbf16, #tpu.memory_space<vmem>>, vector<128x1024xbf16>
    %cst_10 = arith.constant dense<0.000000e+00> : vector<16x1024xf32>
    %15 = tpu.matmul %13, %14, %cst_10 {dimension_numbers = #tpu.dot_dimension_numbers<[1], [0], [0], [1], [0, 0, 1, 1], [], []>} : vector<16x128xbf16>, vector<128x1024xbf16>, vector<16x1024xf32> -> vector<16x1024xf32>
    %c0_11 = arith.constant 0 : index
    %c0_12 = arith.constant 0 : index
    %16 = vector.load %arg5[%c0_11, %c0_12] : memref<1x1024xf32, #tpu.memory_space<vmem>>, vector<1x1024xf32>
    %17 = vector.broadcast %16 : vector<1x1024xf32> to vector<16x1024xf32>
    %18 = arith.addf %15, %17 : vector<16x1024xf32>
    %c0_13 = arith.constant 0 : index
    %c0_14 = arith.constant 0 : index
    %19 = vector.load %arg6[%c0_13, %c0_14] : memref<16x1024xf32, #tpu.memory_space<vmem>>, vector<16x1024xf32>
    tpu.vector_store %arg6[%c0_13, %c0_14], %18 {strides = array<i32>} : memref<16x1024xf32, #tpu.memory_space<vmem>>, vector<16x1024xf32>,
    %c0_15 = arith.constant 0 : index
    %c0_16 = arith.constant 0 : index
    %20 = vector.load %arg7[%c0_15, %c0_16] : memref<16x128xf32, #tpu.memory_space<vmem>>, vector<16x128xf32>
    tpu.vector_store %arg7[%c0_15, %c0_16], %7 {strides = array<i32>} : memref<16x128xf32, #tpu.memory_space<vmem>>, vector<16x128xf32>,
    %c0_17 = arith.constant 0 : index
    %c0_18 = arith.constant 0 : index
    %21 = vector.load %arg8[%c0_17, %c0_18] : memref<16x128xf32, #tpu.memory_space<vmem>>, vector<16x128xf32>
    tpu.vector_store %arg8[%c0_17, %c0_18], %12 {strides = array<i32>} : memref<16x128xf32, #tpu.memory_space<vmem>>, vector<16x128xf32>,
    return
  }
  func.func @transform_0(%arg0: i32) -> (i32, i32) {
    %c0_i32 = arith.constant 0 : i32
    %c0_i32_0 = arith.constant 0 : i32
    return %arg0, %c0_i32 : i32, i32
  }
  func.func @transform_1(%arg0: i32) -> (i32, i32) {
    %c0_i32 = arith.constant 0 : i32
    %c0_i32_0 = arith.constant 0 : i32
    %c0_i32_1 = arith.constant 0 : i32
    return %c0_i32, %c0_i32_0 : i32, i32
  }
  func.func @transform_2(%arg0: i32) -> (i32, i32) {
    %c0_i32 = arith.constant 0 : i32
    %c0_i32_0 = arith.constant 0 : i32
    %c0_i32_1 = arith.constant 0 : i32
    return %c0_i32, %c0_i32_0 : i32, i32
  }
  func.func @transform_3(%arg0: i32) -> (i32, i32) {
    %c0_i32 = arith.constant 0 : i32
    %c0_i32_0 = arith.constant 0 : i32
    %c0_i32_1 = arith.constant 0 : i32
    return %c0_i32, %c0_i32_0 : i32, i32
  }
  func.func @transform_4(%arg0: i32) -> (i32, i32) {
    %c0_i32 = arith.constant 0 : i32
    %c0_i32_0 = arith.constant 0 : i32
    %c0_i32_1 = arith.constant 0 : i32
    return %c0_i32, %c0_i32_0 : i32, i32
  }
  func.func @transform_5(%arg0: i32) -> (i32, i32) {
    %c0_i32 = arith.constant 0 : i32
    %c0_i32_0 = arith.constant 0 : i32
    return %arg0, %c0_i32 : i32, i32
  }
  func.func @transform_6(%arg0: i32) -> (i32, i32) {
    %c0_i32 = arith.constant 0 : i32
    %c0_i32_0 = arith.constant 0 : i32
    return %arg0, %c0_i32 : i32, i32
  }
  func.func @transform_7(%arg0: i32) -> (i32, i32) {
    %c0_i32 = arith.constant 0 : i32
    %c0_i32_0 = arith.constant 0 : i32
    return %arg0, %c0_i32 : i32, i32
  }
}

</mosaic_0001>

<llo_original>
// kernel: tpu_custom_call.1
$region0: #{tpu_custom_call.1}
  #allocation0 [shape = 'u32[]', space=smem, size = 0x4, offset = 0x4, fixed_abs, tag = 'smem constant byte address 0x4 - core index']
  #allocation1 [shape = 'u32[144,128]{1,0:T(1,128)}', space=vmem, size = 0x12000, scoped, tag = 'internal scratch']
  %s0 = inlined_call_operand.hbm [shape: bf16[16,1024], index: 0, kind: input, shape index: {}]
  %s1 = inlined_call_operand.hbm [shape: bf16[1024,128], index: 1, kind: input, shape index: {}]
  %s2 = inlined_call_operand.vmem [shape: f32[1,128], index: 2, kind: input, shape index: {}]
  %s3 = inlined_call_operand.hbm [shape: bf16[128,1024], index: 3, kind: input, shape index: {}]
  %s4 = inlined_call_operand.vmem [shape: f32[1,1024], index: 4, kind: input, shape index: {}]
  %s5 = inlined_call_operand.hbm [shape: f32[16,1024], index: 5, kind: output, shape index: {0}]
  %s6 = inlined_call_operand.hbm [shape: f32[16,128], index: 6, kind: output, shape index: {1}]
  %s7 = inlined_call_operand.hbm [shape: f32[16,128], index: 7, kind: output, shape index: {2}]
  %8 = xla_tuple %s5, %s6, %s7
  %s9 = sld [smem:[#allocation0]]
  $region58: #{tpu_custom_call.1} parent=0
    _
  %s11 = ssub.s32 1, %s9
  %s12 = scalar_select 0, %s11, %s9
  $region1: #{tpu_custom_call.1} parent=0
    #allocation2 [shape = 'u8[32768]{0}', space=vmem, size = 0x8000, scoped, tag = 'input window, operand 0, single buffered']
    #allocation3 [shape = 's32[1]{0}', space=sflag, size = 0x4, scoped, tag = 'scoped memory for tpu_custom_call.1']
    #allocation4 [shape = 's32[1]{0}', space=sflag, size = 0x4, scoped, tag = 'scoped memory for tpu_custom_call.1']
    #allocation5 [shape = 'u8[262144]{0}', space=vmem, size = 0x40000, scoped, tag = 'input window, operand 1, single buffered']
    #allocation6 [shape = 's32[1]{0}', space=sflag, size = 0x4, scoped, tag = 'scoped memory for tpu_custom_call.1']
    #allocation7 [shape = 'u8[262144]{0}', space=vmem, size = 0x40000, scoped, tag = 'input window, operand 3, single buffered']
    #allocation8 [shape = 'u8[65536]{0}', space=vmem, size = 0x10000, scoped, tag = 'output window, operand 0, single buffered']
    #allocation9 [shape = 'u8[8192]{0}', space=vmem, size = 0x2000, scoped, tag = 'output window, operand 1, single buffered']
    #allocation10 [shape = 's32[1]{0}', space=sflag, size = 0x4, scoped, tag = 'scoped memory for tpu_custom_call.1']
    #allocation11 [shape = 'u8[8192]{0}', space=vmem, size = 0x2000, scoped, tag = 'output window, operand 2, single buffered']
    %13 = vsyncpa [#allocation3], 0
    %14 = vsyncpa [#allocation6], 0
    %15 = vsyncpa [#allocation4], 0
    %16 = vsyncpa [#allocation10], 0
    // Predicated region
    $region2: #{tpu_custom_call.1} parent=1 // pred_check
      _
    $region3: #{tpu_custom_call.1} parent=1 // pred_check_branch
      %18 = sbr.rel (0) target = $region5
    $region4: #{tpu_custom_call.1} parent=1 // pred_region
      %s20 = ssub.s32 1024, 1024
      %21 = vsyncadd [#allocation3], %s20
      %s22 = sshll.u32 [#allocation2], 4
      %s23 = int_to_ptr.vmem [resolvable:$true] %s22
      %28 = dma.hbm_to_vmem [thread:$0]  %s0, 1024, %s23, [#allocation3], 512, 512, 32
    $region5: #{tpu_custom_call.1} parent=1 // pred_fallthru
      _
    // Predicated region
    $region6: #{tpu_custom_call.1} parent=1 // pred_check
      _
    $region7: #{tpu_custom_call.1} parent=1 // pred_check_branch
      %30 = sbr.rel (0) target = $region9
    $region8: #{tpu_custom_call.1} parent=1 // pred_region
      %s32 = ssub.s32 8192, 8192
      %33 = vsyncadd [#allocation6], %s32
      %s34 = sshll.u32 [#allocation5], 4
      %s35 = int_to_ptr.vmem [resolvable:$true] %s34
      %40 = dma.hbm_to_vmem [thread:$0]  %s1, 8192, %s35, [#allocation6], 64, 64, 4
    $region9: #{tpu_custom_call.1} parent=1 // pred_fallthru
      _
    // Predicated region
    $region10: #{tpu_custom_call.1} parent=1 // pred_check
      _
    $region11: #{tpu_custom_call.1} parent=1 // pred_check_branch
      %42 = sbr.rel (0) target = $region13
    $region12: #{tpu_custom_call.1} parent=1 // pred_region
      _
    $region13: #{tpu_custom_call.1} parent=1 // pred_fallthru
      _
    // Predicated region
    $region14: #{tpu_custom_call.1} parent=1 // pred_check
      _
    $region15: #{tpu_custom_call.1} parent=1 // pred_check_branch
      %44 = sbr.rel (0) target = $region17
    $region16: #{tpu_custom_call.1} parent=1 // pred_region
      %s46 = ssub.s32 8192, 8192
      %47 = vsyncadd [#allocation6], %s46
      %s48 = sshll.u32 [#allocation7], 4
      %s49 = int_to_ptr.vmem [resolvable:$true] %s48
      %54 = dma.hbm_to_vmem [thread:$0]  %s3, 8192, %s49, [#allocation6], 512, 512, 32
    $region17: #{tpu_custom_call.1} parent=1 // pred_fallthru
      _
    // Predicated region
    $region18: #{tpu_custom_call.1} parent=1 // pred_check
      _
    $region19: #{tpu_custom_call.1} parent=1 // pred_check_branch
      %56 = sbr.rel (0) target = $region21
    $region20: #{tpu_custom_call.1} parent=1 // pred_region
      _
    $region21: #{tpu_custom_call.1} parent=1 // pred_fallthru
      _
    // Predicated region
    $region22: #{tpu_custom_call.1} parent=1 // pred_check
      _
    $region23: #{tpu_custom_call.1} parent=1 // pred_check_branch
      %58 = sbr.rel (0) target = $region25
    $region24: #{tpu_custom_call.1} parent=1 // pred_region
      %59 = dma.done [#allocation3], 1024
    $region25: #{tpu_custom_call.1} parent=1 // pred_fallthru
      _
    // Predicated region
    $region26: #{tpu_custom_call.1} parent=1 // pred_check
      _
    $region27: #{tpu_custom_call.1} parent=1 // pred_check_branch
      %61 = sbr.rel (0) target = $region29
    $region28: #{tpu_custom_call.1} parent=1 // pred_region
      %62 = dma.done [#allocation6], 8192
    $region29: #{tpu_custom_call.1} parent=1 // pred_fallthru
      _
    // Predicated region
    $region30: #{tpu_custom_call.1} parent=1 // pred_check
      _
    $region31: #{tpu_custom_call.1} parent=1 // pred_check_branch
      %64 = sbr.rel (0) target = $region33
    $region32: #{tpu_custom_call.1} parent=1 // pred_region
      %65 = dma.done [#allocation6], 8192
    $region33: #{tpu_custom_call.1} parent=1 // pred_fallthru
      _
    %v67 = vld [vmem:[#allocation2] sm:$0xff]
    %v68 = vld [vmem:[#allocation2 + $0x8] sm:$0xff]
    %v69 = vld [vmem:[#allocation2 + $0x10] sm:$0xff]
    %v70 = vld [vmem:[#allocation2 + $0x18] sm:$0xff]
    %v71 = vld [vmem:[#allocation2 + $0x20] sm:$0xff]
    %v72 = vld [vmem:[#allocation2 + $0x28] sm:$0xff]
    %v73 = vld [vmem:[#allocation2 + $0x30] sm:$0xff]
    %v74 = vld [vmem:[#allocation2 + $0x38] sm:$0xff]
    %v75 = vld [vmem:[#allocation5] sm:$0xf]
    %v76 = vld [vmem:[#allocation5 + $0x4] sm:$0xf]
    %v77 = vld [vmem:[#allocation5 + $0x8] sm:$0xf]
    %v78 = vld [vmem:[#allocation5 + $0xc] sm:$0xf]
    %v79 = vld [vmem:[#allocation5 + $0x10] sm:$0xf]
    %v80 = vld [vmem:[#allocation5 + $0x14] sm:$0xf]
    %v81 = vld [vmem:[#allocation5 + $0x18] sm:$0xf]
    %v82 = vld [vmem:[#allocation5 + $0x1c] sm:$0xf]
    %v83 = vld [vmem:[#allocation5 + $0x20] sm:$0xf]
    %v84 = vld [vmem:[#allocation5 + $0x24] sm:$0xf]
    %v85 = vld [vmem:[#allocation5 + $0x28] sm:$0xf]
    %v86 = vld [vmem:[#allocation5 + $0x2c] sm:$0xf]
    %v87 = vld [vmem:[#allocation5 + $0x30] sm:$0xf]
    %v88 = vld [vmem:[#allocation5 + $0x34] sm:$0xf]
    %v89 = vld [vmem:[#allocation5 + $0x38] sm:$0xf]
    %v90 = vld [vmem:[#allocation5 + $0x3c] sm:$0xf]
    %v91 = vld [vmem:[#allocation5 + $0x40] sm:$0xf]
    %v92 = vld [vmem:[#allocation5 + $0x44] sm:$0xf]
    %v93 = vld [vmem:[#allocation5 + $0x48] sm:$0xf]
    %v94 = vld [vmem:[#allocation5 + $0x4c] sm:$0xf]
    %v95 = vld [vmem:[#allocation5 + $0x50] sm:$0xf]
    %v96 = vld [vmem:[#allocation5 + $0x54] sm:$0xf]
    %v97 = vld [vmem:[#allocation5 + $0x58] sm:$0xf]
    %v98 = vld [vmem:[#allocation5 + $0x5c] sm:$0xf]
    %v99 = vld [vmem:[#allocation5 + $0x60] sm:$0xf]
    %v100 = vld [vmem:[#allocation5 + $0x64] sm:$0xf]
    %v101 = vld [vmem:[#allocation5 + $0x68] sm:$0xf]
    %v102 = vld [vmem:[#allocation5 + $0x6c] sm:$0xf]
    %v103 = vld [vmem:[#allocation5 + $0x70] sm:$0xf]
    %v104 = vld [vmem:[#allocation5 + $0x74] sm:$0xf]
    %v105 = vld [vmem:[#allocation5 + $0x78] sm:$0xf]
    %v106 = vld [vmem:[#allocation5 + $0x7c] sm:$0xf]
    %v107 = vld [vmem:[#allocation5 + $0x80] sm:$0xf]
    %v108 = vld [vmem:[#allocation5 + $0x84] sm:$0xf]
    %v109 = vld [vmem:[#allocation5 + $0x88] sm:$0xf]
    %v110 = vld [vmem:[#allocation5 + $0x8c] sm:$0xf]
    %v111 = vld [vmem:[#allocation5 + $0x90] sm:$0xf]
    %v112 = vld [vmem:[#allocation5 + $0x94] sm:$0xf]
    %v113 = vld [vmem:[#allocation5 + $0x98] sm:$0xf]
    %v114 = vld [vmem:[#allocation5 + $0x9c] sm:$0xf]
    %v115 = vld [vmem:[#allocation5 + $0xa0] sm:$0xf]
    %v116 = vld [vmem:[#allocation5 + $0xa4] sm:$0xf]
    %v117 = vld [vmem:[#allocation5 + $0xa8] sm:$0xf]
    %v118 = vld [vmem:[#allocation5 + $0xac] sm:$0xf]
    %v119 = vld [vmem:[#allocation5 + $0xb0] sm:$0xf]
    %v120 = vld [vmem:[#allocation5 + $0xb4] sm:$0xf]
    %v121 = vld [vmem:[#allocation5 + $0xb8] sm:$0xf]
    %v122 = vld [vmem:[#allocation5 + $0xbc] sm:$0xf]
    %v123 = vld [vmem:[#allocation5 + $0xc0] sm:$0xf]
    %v124 = vld [vmem:[#allocation5 + $0xc4] sm:$0xf]
    %v125 = vld [vmem:[#allocation5 + $0xc8] sm:$0xf]
    %v126 = vld [vmem:[#allocation5 + $0xcc] sm:$0xf]
    %v127 = vld [vmem:[#allocation5 + $0xd0] sm:$0xf]
    %v128 = vld [vmem:[#allocation5 + $0xd4] sm:$0xf]
    %v129 = vld [vmem:[#allocation5 + $0xd8] sm:$0xf]
    %v130 = vld [vmem:[#allocation5 + $0xdc] sm:$0xf]
    %v131 = vld [vmem:[#allocation5 + $0xe0] sm:$0xf]
    %v132 = vld [vmem:[#allocation5 + $0xe4] sm:$0xf]
    %v133 = vld [vmem:[#allocation5 + $0xe8] sm:$0xf]
    %v134 = vld [vmem:[#allocation5 + $0xec] sm:$0xf]
    %v135 = vld [vmem:[#allocation5 + $0xf0] sm:$0xf]
    %v136 = vld [vmem:[#allocation5 + $0xf4] sm:$0xf]
    %v137 = vld [vmem:[#allocation5 + $0xf8] sm:$0xf]
    %v138 = vld [vmem:[#allocation5 + $0xfc] sm:$0xf]
    %v139 = vld [vmem:[#allocation5 + $0x100] sm:$0xf]
    %v140 = vld [vmem:[#allocation5 + $0x104] sm:$0xf]
    %v141 = vld [vmem:[#allocation5 + $0x108] sm:$0xf]
    %v142 = vld [vmem:[#allocation5 + $0x10c] sm:$0xf]
    %v143 = vld [vmem:[#allocation5 + $0x110] sm:$0xf]
    %v144 = vld [vmem:[#allocation5 + $0x114] sm:$0xf]
    %v145 = vld [vmem:[#allocation5 + $0x118] sm:$0xf]
    %v146 = vld [vmem:[#allocation5 + $0x11c] sm:$0xf]
    %v147 = vld [vmem:[#allocation5 + $0x120] sm:$0xf]
    %v148 = vld [vmem:[#allocation5 + $0x124] sm:$0xf]
    %v149 = vld [vmem:[#allocation5 + $0x128] sm:$0xf]
    %v150 = vld [vmem:[#allocation5 + $0x12c] sm:$0xf]
    %v151 = vld [vmem:[#allocation5 + $0x130] sm:$0xf]
    %v152 = vld [vmem:[#allocation5 + $0x134] sm:$0xf]
    %v153 = vld [vmem:[#allocation5 + $0x138] sm:$0xf]
    %v154 = vld [vmem:[#allocation5 + $0x13c] sm:$0xf]
    %v155 = vld [vmem:[#allocation5 + $0x140] sm:$0xf]
    %v156 = vld [vmem:[#allocation5 + $0x144] sm:$0xf]
    %v157 = vld [vmem:[#allocation5 + $0x148] sm:$0xf]
    %v158 = vld [vmem:[#allocation5 + $0x14c] sm:$0xf]
    %v159 = vld [vmem:[#allocation5 + $0x150] sm:$0xf]
    %v160 = vld [vmem:[#allocation5 + $0x154] sm:$0xf]
    %v161 = vld [vmem:[#allocation5 + $0x158] sm:$0xf]
    %v162 = vld [vmem:[#allocation5 + $0x15c] sm:$0xf]
    %v163 = vld [vmem:[#allocation5 + $0x160] sm:$0xf]
    %v164 = vld [vmem:[#allocation5 + $0x164] sm:$0xf]
    %v165 = vld [vmem:[#allocation5 + $0x168] sm:$0xf]
    %v166 = vld [vmem:[#allocation5 + $0x16c] sm:$0xf]
    %v167 = vld [vmem:[#allocation5 + $0x170] sm:$0xf]
    %v168 = vld [vmem:[#allocation5 + $0x174] sm:$0xf]
    %v169 = vld [vmem:[#allocation5 + $0x178] sm:$0xf]
    %v170 = vld [vmem:[#allocation5 + $0x17c] sm:$0xf]
    %v171 = vld [vmem:[#allocation5 + $0x180] sm:$0xf]
    %v172 = vld [vmem:[#allocation5 + $0x184] sm:$0xf]
    %v173 = vld [vmem:[#allocation5 + $0x188] sm:$0xf]
    %v174 = vld [vmem:[#allocation5 + $0x18c] sm:$0xf]
    %v175 = vld [vmem:[#allocation5 + $0x190] sm:$0xf]
    %v176 = vld [vmem:[#allocation5 + $0x194] sm:$0xf]
    %v177 = vld [vmem:[#allocation5 + $0x198] sm:$0xf]
    %v178 = vld [vmem:[#allocation5 + $0x19c] sm:$0xf]
    %v179 = vld [vmem:[#allocation5 + $0x1a0] sm:$0xf]
    %v180 = vld [vmem:[#allocation5 + $0x1a4] sm:$0xf]
    %v181 = vld [vmem:[#allocation5 + $0x1a8] sm:$0xf]
    %v182 = vld [vmem:[#allocation5 + $0x1ac] sm:$0xf]
    %v183 = vld [vmem:[#allocation5 + $0x1b0] sm:$0xf]
    %v184 = vld [vmem:[#allocation5 + $0x1b4] sm:$0xf]
    %v185 = vld [vmem:[#allocation5 + $0x1b8] sm:$0xf]
    %v186 = vld [vmem:[#allocation5 + $0x1bc] sm:$0xf]
    %v187 = vld [vmem:[#allocation5 + $0x1c0] sm:$0xf]
    %v188 = vld [vmem:[#allocation5 + $0x1c4] sm:$0xf]
    %v189 = vld [vmem:[#allocation5 + $0x1c8] sm:$0xf]
    %v190 = vld [vmem:[#allocation5 + $0x1cc] sm:$0xf]
    %v191 = vld [vmem:[#allocation5 + $0x1d0] sm:$0xf]
    %v192 = vld [vmem:[#allocation5 + $0x1d4] sm:$0xf]
    %v193 = vld [vmem:[#allocation5 + $0x1d8] sm:$0xf]
    %v194 = vld [vmem:[#allocation5 + $0x1dc] sm:$0xf]
    %v195 = vld [vmem:[#allocation5 + $0x1e0] sm:$0xf]
    %v196 = vld [vmem:[#allocation5 + $0x1e4] sm:$0xf]
    %v197 = vld [vmem:[#allocation5 + $0x1e8] sm:$0xf]
    %v198 = vld [vmem:[#allocation5 + $0x1ec] sm:$0xf]
    %v199 = vld [vmem:[#allocation5 + $0x1f0] sm:$0xf]
    %v200 = vld [vmem:[#allocation5 + $0x1f4] sm:$0xf]
    %v201 = vld [vmem:[#allocation5 + $0x1f8] sm:$0xf]
    %v202 = vld [vmem:[#allocation5 + $0x1fc] sm:$0xf]
    %v203 = vld [vmem:[%s2] sm:$0x1]
    %v205 = vlaneseq
    %v206 = vshrl.u32 %v205, 7
    %v207 = vsub.s32 0, %v206
    %v208 = vrot.slane %v203, %v207
    %v218 = vunpack.c.l.b16 %v67
    %v219 = vunpack.c.h.b16 %v67
    %v220 = vunpack.c.l.b16 %v68
    %v221 = vunpack.c.h.b16 %v68
    %v222 = vunpack.c.l.b16 %v69
    %v223 = vunpack.c.h.b16 %v69
    %v224 = vunpack.c.l.b16 %v70
    %v225 = vunpack.c.h.b16 %v70
    %v226 = vunpack.c.l.b16 %v71
    %v227 = vunpack.c.h.b16 %v71
    %v228 = vunpack.c.l.b16 %v72
    %v229 = vunpack.c.h.b16 %v72
    %v230 = vunpack.c.l.b16 %v73
    %v231 = vunpack.c.h.b16 %v73
    %v232 = vunpack.c.l.b16 %v74
    %v233 = vunpack.c.h.b16 %v74
    %v234 = vpack.c.b16 %v226, %v218
    %v235 = vpack.c.b16 %v227, %v219
    %v236 = vpack.c.b16 %v228, %v220
    %v237 = vpack.c.b16 %v229, %v221
    %v238 = vpack.c.b16 %v230, %v222
    %v239 = vpack.c.b16 %v231, %v223
    %v240 = vpack.c.b16 %v232, %v224
    %v241 = vpack.c.b16 %v233, %v225
    %v378 = vunpack.c.l.b16 %v75
    %v379 = vunpack.c.l.b16 %v76
    %v380 = vunpack.c.l.b16 %v77
    %v381 = vunpack.c.l.b16 %v78
    %v382 = vunpack.c.l.b16 %v79
    %v383 = vunpack.c.l.b16 %v80
    %v384 = vunpack.c.l.b16 %v81
    %v385 = vunpack.c.l.b16 %v82
    %v386 = vunpack.c.l.b16 %v83
    %v387 = vunpack.c.l.b16 %v84
    %v388 = vunpack.c.l.b16 %v85
    %v389 = vunpack.c.l.b16 %v86
    %v390 = vunpack.c.l.b16 %v87
    %v391 = vunpack.c.l.b16 %v88
    %v392 = vunpack.c.l.b16 %v89
    %v393 = vunpack.c.l.b16 %v90
    %v394 = vunpack.c.l.b16 %v91
    %v395 = vunpack.c.l.b16 %v92
    %v396 = vunpack.c.l.b16 %v93
    %v397 = vunpack.c.l.b16 %v94
    %v398 = vunpack.c.l.b16 %v95
    %v399 = vunpack.c.l.b16 %v96
    %v400 = vunpack.c.l.b16 %v97
    %v401 = vunpack.c.l.b16 %v98
    %v402 = vunpack.c.l.b16 %v99
    %v403 = vunpack.c.l.b16 %v100
    %v404 = vunpack.c.l.b16 %v101
    %v405 = vunpack.c.l.b16 %v102
    %v406 = vunpack.c.l.b16 %v103
    %v407 = vunpack.c.l.b16 %v104
    %v408 = vunpack.c.l.b16 %v105
    %v409 = vunpack.c.l.b16 %v106
    %v410 = vunpack.c.l.b16 %v107
    %v411 = vunpack.c.l.b16 %v108
    %v412 = vunpack.c.l.b16 %v109
    %v413 = vunpack.c.l.b16 %v110
    %v414 = vunpack.c.l.b16 %v111
    %v415 = vunpack.c.l.b16 %v112
    %v416 = vunpack.c.l.b16 %v113
    %v417 = vunpack.c.l.b16 %v114
    %v418 = vunpack.c.l.b16 %v115
    %v419 = vunpack.c.l.b16 %v116
    %v420 = vunpack.c.l.b16 %v117
    %v421 = vunpack.c.l.b16 %v118
    %v422 = vunpack.c.l.b16 %v119
    %v423 = vunpack.c.l.b16 %v120
    %v424 = vunpack.c.l.b16 %v121
    %v425 = vunpack.c.l.b16 %v122
    %v426 = vunpack.c.l.b16 %v123
    %v427 = vunpack.c.l.b16 %v124
    %v428 = vunpack.c.l.b16 %v125
    %v429 = vunpack.c.l.b16 %v126
    %v430 = vunpack.c.l.b16 %v127
    %v431 = vunpack.c.l.b16 %v128
    %v432 = vunpack.c.l.b16 %v129
    %v433 = vunpack.c.l.b16 %v130
    %v434 = vunpack.c.l.b16 %v131
    %v435 = vunpack.c.l.b16 %v132
    %v436 = vunpack.c.l.b16 %v133
    %v437 = vunpack.c.l.b16 %v134
    %v438 = vunpack.c.l.b16 %v135
    %v439 = vunpack.c.l.b16 %v136
    %v440 = vunpack.c.l.b16 %v137
    %v441 = vunpack.c.l.b16 %v138
    %v442 = vunpack.c.l.b16 %v139
    %v443 = vunpack.c.l.b16 %v140
    %v444 = vunpack.c.l.b16 %v141
    %v445 = vunpack.c.l.b16 %v142
    %v446 = vunpack.c.l.b16 %v143
    %v447 = vunpack.c.l.b16 %v144
    %v448 = vunpack.c.l.b16 %v145
    %v449 = vunpack.c.l.b16 %v146
    %v450 = vunpack.c.l.b16 %v147
    %v451 = vunpack.c.l.b16 %v148
    %v452 = vunpack.c.l.b16 %v149
    %v453 = vunpack.c.l.b16 %v150
    %v454 = vunpack.c.l.b16 %v151
    %v455 = vunpack.c.l.b16 %v152
    %v456 = vunpack.c.l.b16 %v153
    %v457 = vunpack.c.l.b16 %v154
    %v458 = vunpack.c.l.b16 %v155
    %v459 = vunpack.c.l.b16 %v156
    %v460 = vunpack.c.l.b16 %v157
    %v461 = vunpack.c.l.b16 %v158
    %v462 = vunpack.c.l.b16 %v159
    %v463 = vunpack.c.l.b16 %v160
    %v464 = vunpack.c.l.b16 %v161
    %v465 = vunpack.c.l.b16 %v162
    %v466 = vunpack.c.l.b16 %v163
    %v467 = vunpack.c.l.b16 %v164
    %v468 = vunpack.c.l.b16 %v165
    %v469 = vunpack.c.l.b16 %v166
    %v470 = vunpack.c.l.b16 %v167
    %v471 = vunpack.c.l.b16 %v168
    %v472 = vunpack.c.l.b16 %v169
    %v473 = vunpack.c.l.b16 %v170
    %v474 = vunpack.c.l.b16 %v171
    %v475 = vunpack.c.l.b16 %v172
    %v476 = vunpack.c.l.b16 %v173
    %v477 = vunpack.c.l.b16 %v174
    %v478 = vunpack.c.l.b16 %v175
    %v479 = vunpack.c.l.b16 %v176
    %v480 = vunpack.c.l.b16 %v177
    %v481 = vunpack.c.l.b16 %v178
    %v482 = vunpack.c.l.b16 %v179
    %v483 = vunpack.c.l.b16 %v180
    %v484 = vunpack.c.l.b16 %v181
    %v485 = vunpack.c.l.b16 %v182
    %v486 = vunpack.c.l.b16 %v183
    %v487 = vunpack.c.l.b16 %v184
    %v488 = vunpack.c.l.b16 %v185
    %v489 = vunpack.c.l.b16 %v186
    %v490 = vunpack.c.l.b16 %v187
    %v491 = vunpack.c.l.b16 %v188
    %v492 = vunpack.c.l.b16 %v189
    %v493 = vunpack.c.l.b16 %v190
    %v494 = vunpack.c.l.b16 %v191
    %v495 = vunpack.c.l.b16 %v192
    %v496 = vunpack.c.l.b16 %v193
    %v497 = vunpack.c.l.b16 %v194
    %v498 = vunpack.c.l.b16 %v195
    %v499 = vunpack.c.l.b16 %v196
    %v500 = vunpack.c.l.b16 %v197
    %v501 = vunpack.c.l.b16 %v198
    %v502 = vunpack.c.l.b16 %v199
    %v503 = vunpack.c.l.b16 %v200
    %v504 = vunpack.c.l.b16 %v201
    %v505 = vunpack.c.l.b16 %v202
    %v506 = vpack.c.b16 %v379, %v378
    %v507 = vpack.c.b16 %v381, %v380
    %v508 = vpack.c.b16 %v383, %v382
    %v509 = vpack.c.b16 %v385, %v384
    %v510 = vpack.c.b16 %v387, %v386
    %v511 = vpack.c.b16 %v389, %v388
    %v512 = vpack.c.b16 %v391, %v390
    %v513 = vpack.c.b16 %v393, %v392
    %v514 = vpack.c.b16 %v395, %v394
    %v515 = vpack.c.b16 %v397, %v396
    %v516 = vpack.c.b16 %v399, %v398
    %v517 = vpack.c.b16 %v401, %v400
    %v518 = vpack.c.b16 %v403, %v402
    %v519 = vpack.c.b16 %v405, %v404
    %v520 = vpack.c.b16 %v407, %v406
    %v521 = vpack.c.b16 %v409, %v408
    %v522 = vpack.c.b16 %v411, %v410
    %v523 = vpack.c.b16 %v413, %v412
    %v524 = vpack.c.b16 %v415, %v414
    %v525 = vpack.c.b16 %v417, %v416
    %v526 = vpack.c.b16 %v419, %v418
    %v527 = vpack.c.b16 %v421, %v420
    %v528 = vpack.c.b16 %v423, %v422
    %v529 = vpack.c.b16 %v425, %v424
    %v530 = vpack.c.b16 %v427, %v426
    %v531 = vpack.c.b16 %v429, %v428
    %v532 = vpack.c.b16 %v431, %v430
    %v533 = vpack.c.b16 %v433, %v432
    %v534 = vpack.c.b16 %v435, %v434
    %v535 = vpack.c.b16 %v437, %v436
    %v536 = vpack.c.b16 %v439, %v438
    %v537 = vpack.c.b16 %v441, %v440
    %v538 = vpack.c.b16 %v443, %v442
    %v539 = vpack.c.b16 %v445, %v444
    %v540 = vpack.c.b16 %v447, %v446
    %v541 = vpack.c.b16 %v449, %v448
    %v542 = vpack.c.b16 %v451, %v450
    %v543 = vpack.c.b16 %v453, %v452
    %v544 = vpack.c.b16 %v455, %v454
    %v545 = vpack.c.b16 %v457, %v456
    %v546 = vpack.c.b16 %v459, %v458
    %v547 = vpack.c.b16 %v461, %v460
    %v548 = vpack.c.b16 %v463, %v462
    %v549 = vpack.c.b16 %v465, %v464
    %v550 = vpack.c.b16 %v467, %v466
    %v551 = vpack.c.b16 %v469, %v468
    %v552 = vpack.c.b16 %v471, %v470
    %v553 = vpack.c.b16 %v473, %v472
    %v554 = vpack.c.b16 %v475, %v474
    %v555 = vpack.c.b16 %v477, %v476
    %v556 = vpack.c.b16 %v479, %v478
    %v557 = vpack.c.b16 %v481, %v480
    %v558 = vpack.c.b16 %v483, %v482
    %v559 = vpack.c.b16 %v485, %v484
    %v560 = vpack.c.b16 %v487, %v486
    %v561 = vpack.c.b16 %v489, %v488
    %v562 = vpack.c.b16 %v491, %v490
    %v563 = vpack.c.b16 %v493, %v492
    %v564 = vpack.c.b16 %v495, %v494
    %v565 = vpack.c.b16 %v497, %v496
    %v566 = vpack.c.b16 %v499, %v498
    %v567 = vpack.c.b16 %v501, %v500
    %v568 = vpack.c.b16 %v503, %v502
    %v569 = vpack.c.b16 %v505, %v504
    %634 = vmatprep.subr.bf16.mxu0 0
    %635 = vmatpush1.bf16.msra.mxu0 %v506
    %636 = vmatprep.subr.bf16.mxu0 0
    %637 = vmatpush1.bf16.msra.mxu0 %v507
    %638 = vmatprep.subr.bf16.mxu0 0
    %639 = vmatpush1.bf16.msra.mxu0 %v508
    %640 = vmatprep.subr.bf16.mxu0 0
    %641 = vmatpush1.bf16.msra.mxu0 %v509
    %642 = vmatprep.subr.bf16.mxu0 0
    %643 = vmatpush1.bf16.msra.mxu0 %v510
    %644 = vmatprep.subr.bf16.mxu0 0
    %645 = vmatpush1.bf16.msra.mxu0 %v511
    %646 = vmatprep.subr.bf16.mxu0 0
    %647 = vmatpush1.bf16.msra.mxu0 %v512
    %648 = vmatprep.subr.bf16.mxu0 0
    %649 = vmatpush1.bf16.msra.mxu0 %v513
    %650 = vmatprep.subr.bf16.mxu0 0
    %651 = vmatpush1.bf16.msra.mxu0 %v514
    %652 = vmatprep.subr.bf16.mxu0 0
    %653 = vmatpush1.bf16.msra.mxu0 %v515
    %654 = vmatprep.subr.bf16.mxu0 0
    %655 = vmatpush1.bf16.msra.mxu0 %v516
    %656 = vmatprep.subr.bf16.mxu0 0
    %657 = vmatpush1.bf16.msra.mxu0 %v517
    %658 = vmatprep.subr.bf16.mxu0 0
    %659 = vmatpush1.bf16.msra.mxu0 %v518
    %660 = vmatprep.subr.bf16.mxu0 0
    %661 = vmatpush1.bf16.msra.mxu0 %v519
    %662 = vmatprep.subr.bf16.mxu0 0
    %663 = vmatpush1.bf16.msra.mxu0 %v520
    %664 = vmatprep.subr.bf16.mxu0 0
    %665 = vmatpush1.bf16.msra.mxu0 %v521
    %666 = vmatprep.mubr.bf16.mxu0 %v235
    %667 = vmatmul.mubr.bf16.gmra.mrb[0].mxu0 %v234
    %v668 = vpop.f32.mrb[0].mxu0
    %v669 = vadd.f32 %v208, %v668
    %v670 = vpop.f32.mrb[0].mxu0
    %v671 = vpop.f32.mrb[0].mxu0
    %v672 = vadd.f32 %v208, %v671
    %v673 = vpop.f32.mrb[0].mxu0
    %674 = vdwg.mxu0
    %675 = vmatprep.subr.bf16.mxu0 0
    %676 = vmatpush1.bf16.msra.mxu0 %v522
    %677 = vmatprep.subr.bf16.mxu0 0
    %678 = vmatpush1.bf16.msra.mxu0 %v523
    %679 = vmatprep.subr.bf16.mxu0 0
    %680 = vmatpush1.bf16.msra.mxu0 %v524
    %681 = vmatprep.subr.bf16.mxu0 0
    %682 = vmatpush1.bf16.msra.mxu0 %v525
    %683 = vmatprep.subr.bf16.mxu0 0
    %684 = vmatpush1.bf16.msra.mxu0 %v526
    %685 = vmatprep.subr.bf16.mxu0 0
    %686 = vmatpush1.bf16.msra.mxu0 %v527
    %687 = vmatprep.subr.bf16.mxu0 0
    %688 = vmatpush1.bf16.msra.mxu0 %v528
    %689 = vmatprep.subr.bf16.mxu0 0
    %690 = vmatpush1.bf16.msra.mxu0 %v529
    %691 = vmatprep.subr.bf16.mxu0 0
    %692 = vmatpush1.bf16.msra.mxu0 %v530
    %693 = vmatprep.subr.bf16.mxu0 0
    %694 = vmatpush1.bf16.msra.mxu0 %v531
    %695 = vmatprep.subr.bf16.mxu0 0
    %696 = vmatpush1.bf16.msra.mxu0 %v532
    %697 = vmatprep.subr.bf16.mxu0 0
    %698 = vmatpush1.bf16.msra.mxu0 %v533
    %699 = vmatprep.subr.bf16.mxu0 0
    %700 = vmatpush1.bf16.msra.mxu0 %v534
    %701 = vmatprep.subr.bf16.mxu0 0
    %702 = vmatpush1.bf16.msra.mxu0 %v535
    %703 = vmatprep.subr.bf16.mxu0 0
    %704 = vmatpush1.bf16.msra.mxu0 %v536
    %705 = vmatprep.subr.bf16.mxu0 0
    %706 = vmatpush1.bf16.msra.mxu0 %v537
    %707 = vmatprep.mubr.bf16.mxu0 %v237
    %708 = vmatmul.mubr.bf16.gmra.mrb[0].mxu0 %v236
    %v709 = vpop.f32.mrb[0].mxu0
    %v710 = vadd.f32 %v669, %v709
    %v711 = vpop.f32.mrb[0].mxu0
    %v712 = vpop.f32.mrb[0].mxu0
    %v713 = vadd.f32 %v672, %v712
    %v714 = vpop.f32.mrb[0].mxu0
    %715 = vdwg.mxu0
    %716 = vmatprep.subr.bf16.mxu0 0
    %717 = vmatpush1.bf16.msra.mxu0 %v538
    %718 = vmatprep.subr.bf16.mxu0 0
    %719 = vmatpush1.bf16.msra.mxu0 %v539
    %720 = vmatprep.subr.bf16.mxu0 0
    %721 = vmatpush1.bf16.msra.mxu0 %v540
    %722 = vmatprep.subr.bf16.mxu0 0
    %723 = vmatpush1.bf16.msra.mxu0 %v541
    %724 = vmatprep.subr.bf16.mxu0 0
    %725 = vmatpush1.bf16.msra.mxu0 %v542
    %726 = vmatprep.subr.bf16.mxu0 0
    %727 = vmatpush1.bf16.msra.mxu0 %v543
    %728 = vmatprep.subr.bf16.mxu0 0
    %729 = vmatpush1.bf16.msra.mxu0 %v544
    %730 = vmatprep.subr.bf16.mxu0 0
    %731 = vmatpush1.bf16.msra.mxu0 %v545
    %732 = vmatprep.subr.bf16.mxu0 0
    %733 = vmatpush1.bf16.msra.mxu0 %v546
    %734 = vmatprep.subr.bf16.mxu0 0
    %735 = vmatpush1.bf16.msra.mxu0 %v547
    %736 = vmatprep.subr.bf16.mxu0 0
    %737 = vmatpush1.bf16.msra.mxu0 %v548
    %738 = vmatprep.subr.bf16.mxu0 0
    %739 = vmatpush1.bf16.msra.mxu0 %v549
    %740 = vmatprep.subr.bf16.mxu0 0
    %741 = vmatpush1.bf16.msra.mxu0 %v550
    %742 = vmatprep.subr.bf16.mxu0 0
    %743 = vmatpush1.bf16.msra.mxu0 %v551
    %744 = vmatprep.subr.bf16.mxu0 0
    %745 = vmatpush1.bf16.msra.mxu0 %v552
    %746 = vmatprep.subr.bf16.mxu0 0
    %747 = vmatpush1.bf16.msra.mxu0 %v553
    %748 = vmatprep.mubr.bf16.mxu0 %v239
    %749 = vmatmul.mubr.bf16.gmra.mrb[0].mxu0 %v238
    %v750 = vpop.f32.mrb[0].mxu0
    %v751 = vadd.f32 %v710, %v750
    %v752 = vpop.f32.mrb[0].mxu0
    %v753 = vpop.f32.mrb[0].mxu0
    %v754 = vadd.f32 %v713, %v753
    %v755 = vpop.f32.mrb[0].mxu0
    %756 = vdwg.mxu0
    %757 = vmatprep.subr.bf16.mxu0 0
    %758 = vmatpush1.bf16.msra.mxu0 %v554
    %759 = vmatprep.subr.bf16.mxu0 0
    %760 = vmatpush1.bf16.msra.mxu0 %v555
    %761 = vmatprep.subr.bf16.mxu0 0
    %762 = vmatpush1.bf16.msra.mxu0 %v556
    %763 = vmatprep.subr.bf16.mxu0 0
    %764 = vmatpush1.bf16.msra.mxu0 %v557
    %765 = vmatprep.subr.bf16.mxu0 0
    %766 = vmatpush1.bf16.msra.mxu0 %v558
    %767 = vmatprep.subr.bf16.mxu0 0
    %768 = vmatpush1.bf16.msra.mxu0 %v559
    %769 = vmatprep.subr.bf16.mxu0 0
    %770 = vmatpush1.bf16.msra.mxu0 %v560
    %771 = vmatprep.subr.bf16.mxu0 0
    %772 = vmatpush1.bf16.msra.mxu0 %v561
    %773 = vmatprep.subr.bf16.mxu0 0
    %774 = vmatpush1.bf16.msra.mxu0 %v562
    %775 = vmatprep.subr.bf16.mxu0 0
    %776 = vmatpush1.bf16.msra.mxu0 %v563
    %777 = vmatprep.subr.bf16.mxu0 0
    %778 = vmatpush1.bf16.msra.mxu0 %v564
    %779 = vmatprep.subr.bf16.mxu0 0
    %780 = vmatpush1.bf16.msra.mxu0 %v565
    %781 = vmatprep.subr.bf16.mxu0 0
    %782 = vmatpush1.bf16.msra.mxu0 %v566
    %783 = vmatprep.subr.bf16.mxu0 0
    %784 = vmatpush1.bf16.msra.mxu0 %v567
    %785 = vmatprep.subr.bf16.mxu0 0
    %786 = vmatpush1.bf16.msra.mxu0 %v568
    %787 = vmatprep.subr.bf16.mxu0 0
    %788 = vmatpush1.bf16.msra.mxu0 %v569
    %789 = vmatprep.mubr.bf16.mxu0 %v241
    %790 = vmatmul.mubr.bf16.gmra.mrb[0].mxu0 %v240
    %v791 = vpop.f32.mrb[0].mxu0
    %v792 = vadd.f32 %v751, %v791
    %v793 = vpop.f32.mrb[0].mxu0
    %v794 = vpop.f32.mrb[0].mxu0
    %v795 = vadd.f32 %v754, %v794
    %v796 = vpop.f32.mrb[0].mxu0
    %797 = vdwg.mxu0
    %v798 = vmax.f32 %v792, 0.0
    %v799 = vmax.f32 %v795, 0.0
    %v800 = vmul.f32 %v798, 100.0
    %v801 = vmul.f32 %v799, 100.0
    %v802 = vceil.f32 %v800
    %v803 = vceil.f32 %v801
    %v804 = vmul.f32 %v802, 0.01
    %v805 = vmul.f32 %v803, 0.01
    %v806 = vpack.c.bf16 %v805, %v804
    %v807 = vld [vmem:[#allocation7] sm:$0xff]
    %v808 = vld [vmem:[#allocation7 + $0x8] sm:$0xff]
    %v809 = vld [vmem:[#allocation7 + $0x10] sm:$0xff]
    %v810 = vld [vmem:[#allocation7 + $0x18] sm:$0xff]
    %v811 = vld [vmem:[#allocation7 + $0x20] sm:$0xff]
    %v812 = vld [vmem:[#allocation7 + $0x28] sm:$0xff]
    %v813 = vld [vmem:[#allocation7 + $0x30] sm:$0xff]
    %v814 = vld [vmem:[#allocation7 + $0x38] sm:$0xff]
    %v815 = vld [vmem:[#allocation7 + $0x40] sm:$0xff]
    %v816 = vld [vmem:[#allocation7 + $0x48] sm:$0xff]
    %v817 = vld [vmem:[#allocation7 + $0x50] sm:$0xff]
    %v818 = vld [vmem:[#allocation7 + $0x58] sm:$0xff]
    %v819 = vld [vmem:[#allocation7 + $0x60] sm:$0xff]
    %v820 = vld [vmem:[#allocation7 + $0x68] sm:$0xff]
    %v821 = vld [vmem:[#allocation7 + $0x70] sm:$0xff]
    %v822 = vld [vmem:[#allocation7 + $0x78] sm:$0xff]
    %v823 = vld [vmem:[#allocation7 + $0x80] sm:$0xff]
    %v824 = vld [vmem:[#allocation7 + $0x88] sm:$0xff]
    %v825 = vld [vmem:[#allocation7 + $0x90] sm:$0xff]
    %v826 = vld [vmem:[#allocation7 + $0x98] sm:$0xff]
    %v827 = vld [vmem:[#allocation7 + $0xa0] sm:$0xff]
    %v828 = vld [vmem:[#allocation7 + $0xa8] sm:$0xff]
    %v829 = vld [vmem:[#allocation7 + $0xb0] sm:$0xff]
    %v830 = vld [vmem:[#allocation7 + $0xb8] sm:$0xff]
    %v831 = vld [vmem:[#allocation7 + $0xc0] sm:$0xff]
    %v832 = vld [vmem:[#allocation7 + $0xc8] sm:$0xff]
    %v833 = vld [vmem:[#allocation7 + $0xd0] sm:$0xff]
    %v834 = vld [vmem:[#allocation7 + $0xd8] sm:$0xff]
    %v835 = vld [vmem:[#allocation7 + $0xe0] sm:$0xff]
    %v836 = vld [vmem:[#allocation7 + $0xe8] sm:$0xff]
    %v837 = vld [vmem:[#allocation7 + $0xf0] sm:$0xff]
    %v838 = vld [vmem:[#allocation7 + $0xf8] sm:$0xff]
    %v839 = vld [vmem:[#allocation7 + $0x100] sm:$0xff]
    %v840 = vld [vmem:[#allocation7 + $0x108] sm:$0xff]
    %v841 = vld [vmem:[#allocation7 + $0x110] sm:$0xff]
    %v842 = vld [vmem:[#allocation7 + $0x118] sm:$0xff]
    %v843 = vld [vmem:[#allocation7 + $0x120] sm:$0xff]
    %v844 = vld [vmem:[#allocation7 + $0x128] sm:$0xff]
    %v845 = vld [vmem:[#allocation7 + $0x130] sm:$0xff]
    %v846 = vld [vmem:[#allocation7 + $0x138] sm:$0xff]
    %v847 = vld [vmem:[#allocation7 + $0x140] sm:$0xff]
    %v848 = vld [vmem:[#allocation7 + $0x148] sm:$0xff]
    %v849 = vld [vmem:[#allocation7 + $0x150] sm:$0xff]
    %v850 = vld [vmem:[#allocation7 + $0x158] sm:$0xff]
    %v851 = vld [vmem:[#allocation7 + $0x160] sm:$0xff]
    %v852 = vld [vmem:[#allocation7 + $0x168] sm:$0xff]
    %v853 = vld [vmem:[#allocation7 + $0x170] sm:$0xff]
    %v854 = vld [vmem:[#allocation7 + $0x178] sm:$0xff]
    %v855 = vld [vmem:[#allocation7 + $0x180] sm:$0xff]
    %v856 = vld [vmem:[#allocation7 + $0x188] sm:$0xff]
    %v857 = vld [vmem:[#allocation7 + $0x190] sm:$0xff]
    %v858 = vld [vmem:[#allocation7 + $0x198] sm:$0xff]
    %v859 = vld [vmem:[#allocation7 + $0x1a0] sm:$0xff]
    %v860 = vld [vmem:[#allocation7 + $0x1a8] sm:$0xff]
    %v861 = vld [vmem:[#allocation7 + $0x1b0] sm:$0xff]
    %v862 = vld [vmem:[#allocation7 + $0x1b8] sm:$0xff]
    %v863 = vld [vmem:[#allocation7 + $0x1c0] sm:$0xff]
    %v864 = vld [vmem:[#allocation7 + $0x1c8] sm:$0xff]
    %v865 = vld [vmem:[#allocation7 + $0x1d0] sm:$0xff]
    %v866 = vld [vmem:[#allocation7 + $0x1d8] sm:$0xff]
    %v867 = vld [vmem:[#allocation7 + $0x1e0] sm:$0xff]
    %v868 = vld [vmem:[#allocation7 + $0x1e8] sm:$0xff]
    %v869 = vld [vmem:[#allocation7 + $0x1f0] sm:$0xff]
    %v870 = vld [vmem:[#allocation7 + $0x1f8] sm:$0xff]
    %v871 = vld [vmem:[%s4] sm:$0xff]
    %v873 = vlaneseq
    %v874 = vshrl.u32 %v873, 7
    %v875 = vsub.s32 0, %v874
    %v876 = vrot.slane %v871, %v875
    %v877 = vlaneseq
    %v878 = vshrl.u32 %v877, 7
    %v879 = vsub.s32 1, %v878
    %v880 = vrot.slane %v871, %v879
    %v881 = vlaneseq
    %v882 = vshrl.u32 %v881, 7
    %v883 = vsub.s32 2, %v882
    %v884 = vrot.slane %v871, %v883
    %v885 = vlaneseq
    %v886 = vshrl.u32 %v885, 7
    %v887 = vsub.s32 3, %v886
    %v888 = vrot.slane %v871, %v887
    %v889 = vlaneseq
    %v890 = vshrl.u32 %v889, 7
    %v891 = vsub.s32 4, %v890
    %v892 = vrot.slane %v871, %v891
    %v893 = vlaneseq
    %v894 = vshrl.u32 %v893, 7
    %v895 = vsub.s32 5, %v894
    %v896 = vrot.slane %v871, %v895
    %v897 = vlaneseq
    %v898 = vshrl.u32 %v897, 7
    %v899 = vsub.s32 6, %v898
    %v900 = vrot.slane %v871, %v899
    %v901 = vlaneseq
    %v902 = vshrl.u32 %v901, 7
    %v903 = vsub.s32 7, %v902
    %v904 = vrot.slane %v871, %v903
    %v977 = vunpack.c.l.b16 %v807
    %v978 = vunpack.c.h.b16 %v807
    %v979 = vunpack.c.l.b16 %v808
    %v980 = vunpack.c.h.b16 %v808
    %v981 = vunpack.c.l.b16 %v809
    %v982 = vunpack.c.h.b16 %v809
    %v983 = vunpack.c.l.b16 %v810
    %v984 = vunpack.c.h.b16 %v810
    %v985 = vunpack.c.l.b16 %v811
    %v986 = vunpack.c.h.b16 %v811
    %v987 = vunpack.c.l.b16 %v812
    %v988 = vunpack.c.h.b16 %v812
    %v989 = vunpack.c.l.b16 %v813
    %v990 = vunpack.c.h.b16 %v813
    %v991 = vunpack.c.l.b16 %v814
    %v992 = vunpack.c.h.b16 %v814
    %v993 = vunpack.c.l.b16 %v815
    %v994 = vunpack.c.h.b16 %v815
    %v995 = vunpack.c.l.b16 %v816
    %v996 = vunpack.c.h.b16 %v816
    %v997 = vunpack.c.l.b16 %v817
    %v998 = vunpack.c.h.b16 %v817
    %v999 = vunpack.c.l.b16 %v818
    %v1000 = vunpack.c.h.b16 %v818
    %v1001 = vunpack.c.l.b16 %v819
    %v1002 = vunpack.c.h.b16 %v819
    %v1003 = vunpack.c.l.b16 %v820
    %v1004 = vunpack.c.h.b16 %v820
    %v1005 = vunpack.c.l.b16 %v821
    %v1006 = vunpack.c.h.b16 %v821
    %v1007 = vunpack.c.l.b16 %v822
    %v1008 = vunpack.c.h.b16 %v822
    %v1009 = vunpack.c.l.b16 %v823
    %v1010 = vunpack.c.h.b16 %v823
    %v1011 = vunpack.c.l.b16 %v824
    %v1012 = vunpack.c.h.b16 %v824
    %v1013 = vunpack.c.l.b16 %v825
    %v1014 = vunpack.c.h.b16 %v825
    %v1015 = vunpack.c.l.b16 %v826
    %v1016 = vunpack.c.h.b16 %v826
    %v1017 = vunpack.c.l.b16 %v827
    %v1018 = vunpack.c.h.b16 %v827
    %v1019 = vunpack.c.l.b16 %v828
    %v1020 = vunpack.c.h.b16 %v828
    %v1021 = vunpack.c.l.b16 %v829
    %v1022 = vunpack.c.h.b16 %v829
    %v1023 = vunpack.c.l.b16 %v830
    %v1024 = vunpack.c.h.b16 %v830
    %v1025 = vunpack.c.l.b16 %v831
    %v1026 = vunpack.c.h.b16 %v831
    %v1027 = vunpack.c.l.b16 %v832
    %v1028 = vunpack.c.h.b16 %v832
    %v1029 = vunpack.c.l.b16 %v833
    %v1030 = vunpack.c.h.b16 %v833
    %v1031 = vunpack.c.l.b16 %v834
    %v1032 = vunpack.c.h.b16 %v834
    %v1033 = vunpack.c.l.b16 %v835
    %v1034 = vunpack.c.h.b16 %v835
    %v1035 = vunpack.c.l.b16 %v836
    %v1036 = vunpack.c.h.b16 %v836
    %v1037 = vunpack.c.l.b16 %v837
    %v1038 = vunpack.c.h.b16 %v837
    %v1039 = vunpack.c.l.b16 %v838
    %v1040 = vunpack.c.h.b16 %v838
    %v1041 = vunpack.c.l.b16 %v839
    %v1042 = vunpack.c.h.b16 %v839
    %v1043 = vunpack.c.l.b16 %v840
    %v1044 = vunpack.c.h.b16 %v840
    %v1045 = vunpack.c.l.b16 %v841
    %v1046 = vunpack.c.h.b16 %v841
    %v1047 = vunpack.c.l.b16 %v842
    %v1048 = vunpack.c.h.b16 %v842
    %v1049 = vunpack.c.l.b16 %v843
    %v1050 = vunpack.c.h.b16 %v843
    %v1051 = vunpack.c.l.b16 %v844
    %v1052 = vunpack.c.h.b16 %v844
    %v1053 = vunpack.c.l.b16 %v845
    %v1054 = vunpack.c.h.b16 %v845
    %v1055 = vunpack.c.l.b16 %v846
    %v1056 = vunpack.c.h.b16 %v846
    %v1057 = vunpack.c.l.b16 %v847
    %v1058 = vunpack.c.h.b16 %v847
    %v1059 = vunpack.c.l.b16 %v848
    %v1060 = vunpack.c.h.b16 %v848
    %v1061 = vunpack.c.l.b16 %v849
    %v1062 = vunpack.c.h.b16 %v849
    %v1063 = vunpack.c.l.b16 %v850
    %v1064 = vunpack.c.h.b16 %v850
    %v1065 = vunpack.c.l.b16 %v851
    %v1066 = vunpack.c.h.b16 %v851
    %v1067 = vunpack.c.l.b16 %v852
    %v1068 = vunpack.c.h.b16 %v852
    %v1069 = vunpack.c.l.b16 %v853
    %v1070 = vunpack.c.h.b16 %v853
    %v1071 = vunpack.c.l.b16 %v854
    %v1072 = vunpack.c.h.b16 %v854
    %v1073 = vunpack.c.l.b16 %v855
    %v1074 = vunpack.c.h.b16 %v855
    %v1075 = vunpack.c.l.b16 %v856
    %v1076 = vunpack.c.h.b16 %v856
    %v1077 = vunpack.c.l.b16 %v857
    %v1078 = vunpack.c.h.b16 %v857
    %v1079 = vunpack.c.l.b16 %v858
    %v1080 = vunpack.c.h.b16 %v858
    %v1081 = vunpack.c.l.b16 %v859
    %v1082 = vunpack.c.h.b16 %v859
    %v1083 = vunpack.c.l.b16 %v860
    %v1084 = vunpack.c.h.b16 %v860
    %v1085 = vunpack.c.l.b16 %v861
    %v1086 = vunpack.c.h.b16 %v861
    %v1087 = vunpack.c.l.b16 %v862
    %v1088 = vunpack.c.h.b16 %v862
    %v1089 = vunpack.c.l.b16 %v863
    %v1090 = vunpack.c.h.b16 %v863
    %v1091 = vunpack.c.l.b16 %v864
    %v1092 = vunpack.c.h.b16 %v864
    %v1093 = vunpack.c.l.b16 %v865
    %v1094 = vunpack.c.h.b16 %v865
    %v1095 = vunpack.c.l.b16 %v866
    %v1096 = vunpack.c.h.b16 %v866
    %v1097 = vunpack.c.l.b16 %v867
    %v1098 = vunpack.c.h.b16 %v867
    %v1099 = vunpack.c.l.b16 %v868
    %v1100 = vunpack.c.h.b16 %v868
    %v1101 = vunpack.c.l.b16 %v869
    %v1102 = vunpack.c.h.b16 %v869
    %v1103 = vunpack.c.l.b16 %v870
    %v1104 = vunpack.c.h.b16 %v870
    %v1105 = vpack.c.b16 %v985, %v977
    %v1106 = vpack.c.b16 %v986, %v978
    %v1107 = vpack.c.b16 %v987, %v979
    %v1108 = vpack.c.b16 %v988, %v980
    %v1109 = vpack.c.b16 %v989, %v981
    %v1110 = vpack.c.b16 %v990, %v982
    %v1111 = vpack.c.b16 %v991, %v983
    %v1112 = vpack.c.b16 %v992, %v984
    %v1113 = vpack.c.b16 %v1001, %v993
    %v1114 = vpack.c.b16 %v1002, %v994
    %v1115 = vpack.c.b16 %v1003, %v995
    %v1116 = vpack.c.b16 %v1004, %v996
    %v1117 = vpack.c.b16 %v1005, %v997
    %v1118 = vpack.c.b16 %v1006, %v998
    %v1119 = vpack.c.b16 %v1007, %v999
    %v1120 = vpack.c.b16 %v1008, %v1000
    %v1121 = vpack.c.b16 %v1017, %v1009
    %v1122 = vpack.c.b16 %v1018, %v1010
    %v1123 = vpack.c.b16 %v1019, %v1011
    %v1124 = vpack.c.b16 %v1020, %v1012
    %v1125 = vpack.c.b16 %v1021, %v1013
    %v1126 = vpack.c.b16 %v1022, %v1014
    %v1127 = vpack.c.b16 %v1023, %v1015
    %v1128 = vpack.c.b16 %v1024, %v1016
    %v1129 = vpack.c.b16 %v1033, %v1025
    %v1130 = vpack.c.b16 %v1034, %v1026
    %v1131 = vpack.c.b16 %v1035, %v1027
    %v1132 = vpack.c.b16 %v1036, %v1028
    %v1133 = vpack.c.b16 %v1037, %v1029
    %v1134 = vpack.c.b16 %v1038, %v1030
    %v1135 = vpack.c.b16 %v1039, %v1031
    %v1136 = vpack.c.b16 %v1040, %v1032
    %v1137 = vpack.c.b16 %v1049, %v1041
    %v1138 = vpack.c.b16 %v1050, %v1042
    %v1139 = vpack.c.b16 %v1051, %v1043
    %v1140 = vpack.c.b16 %v1052, %v1044
    %v1141 = vpack.c.b16 %v1053, %v1045
    %v1142 = vpack.c.b16 %v1054, %v1046
    %v1143 = vpack.c.b16 %v1055, %v1047
    %v1144 = vpack.c.b16 %v1056, %v1048
    %v1145 = vpack.c.b16 %v1065, %v1057
    %v1146 = vpack.c.b16 %v1066, %v1058
    %v1147 = vpack.c.b16 %v1067, %v1059
    %v1148 = vpack.c.b16 %v1068, %v1060
    %v1149 = vpack.c.b16 %v1069, %v1061
    %v1150 = vpack.c.b16 %v1070, %v1062
    %v1151 = vpack.c.b16 %v1071, %v1063
    %v1152 = vpack.c.b16 %v1072, %v1064
    %v1153 = vpack.c.b16 %v1081, %v1073
    %v1154 = vpack.c.b16 %v1082, %v1074
    %v1155 = vpack.c.b16 %v1083, %v1075
    %v1156 = vpack.c.b16 %v1084, %v1076
    %v1157 = vpack.c.b16 %v1085, %v1077
    %v1158 = vpack.c.b16 %v1086, %v1078
    %v1159 = vpack.c.b16 %v1087, %v1079
    %v1160 = vpack.c.b16 %v1088, %v1080
    %v1161 = vpack.c.b16 %v1097, %v1089
    %v1162 = vpack.c.b16 %v1098, %v1090
    %v1163 = vpack.c.b16 %v1099, %v1091
    %v1164 = vpack.c.b16 %v1100, %v1092
    %v1165 = vpack.c.b16 %v1101, %v1093
    %v1166 = vpack.c.b16 %v1102, %v1094
    %v1167 = vpack.c.b16 %v1103, %v1095
    %v1168 = vpack.c.b16 %v1104, %v1096
    %1233 = vmatprep.subr.bf16.mxu0 %v1106
    %1234 = vmatpush1.bf16.msra.mxu0 %v1105
    %1235 = vmatprep.subr.bf16.mxu0 %v1114
    %1236 = vmatpush1.bf16.msra.mxu0 %v1113
    %1237 = vmatprep.subr.bf16.mxu0 %v1122
    %1238 = vmatpush1.bf16.msra.mxu0 %v1121
    %1239 = vmatprep.subr.bf16.mxu0 %v1130
    %1240 = vmatpush1.bf16.msra.mxu0 %v1129
    %1241 = vmatprep.subr.bf16.mxu0 %v1138
    %1242 = vmatpush1.bf16.msra.mxu0 %v1137
    %1243 = vmatprep.subr.bf16.mxu0 %v1146
    %1244 = vmatpush1.bf16.msra.mxu0 %v1145
    %1245 = vmatprep.subr.bf16.mxu0 %v1154
    %1246 = vmatpush1.bf16.msra.mxu0 %v1153
    %1247 = vmatprep.subr.bf16.mxu0 %v1162
    %1248 = vmatpush1.bf16.msra.mxu0 %v1161
    %1249 = vmatprep.subr.bf16.mxu0 0
    %1250 = vmatpush1.bf16.msra.mxu0 0
    %1251 = vmatprep.subr.bf16.mxu0 0
    %1252 = vmatpush1.bf16.msra.mxu0 0
    %1253 = vmatprep.subr.bf16.mxu0 0
    %1254 = vmatpush1.bf16.msra.mxu0 0
    %1255 = vmatprep.subr.bf16.mxu0 0
    %1256 = vmatpush1.bf16.msra.mxu0 0
    %1257 = vmatprep.subr.bf16.mxu0 0
    %1258 = vmatpush1.bf16.msra.mxu0 0
    %1259 = vmatprep.subr.bf16.mxu0 0
    %1260 = vmatpush1.bf16.msra.mxu0 0
    %1261 = vmatprep.subr.bf16.mxu0 0
    %1262 = vmatpush1.bf16.msra.mxu0 0
    %1263 = vmatprep.subr.bf16.mxu0 0
    %1264 = vmatpush1.bf16.msra.mxu0 0
    %1265 = vmatprep.mubr.bf16.mxu0 0
    %1266 = vmatmul.mubr.bf16.gmra.mrb[0].mxu0 %v806
    %v1267 = vpop.f32.mrb[0].mxu0
    %v1268 = vadd.f32 %v876, %v1267
    %v1269 = vpop.f32.mrb[0].mxu0
    %v1270 = vadd.f32 %v880, %v1269
    %v1271 = vpop.f32.mrb[0].mxu0
    %v1272 = vadd.f32 %v876, %v1271
    %v1273 = vpop.f32.mrb[0].mxu0
    %v1274 = vadd.f32 %v880, %v1273
    %1275 = vdwg.mxu0
    %1276 = vmatprep.subr.bf16.mxu0 %v1108
    %1277 = vmatpush1.bf16.msra.mxu0 %v1107
    %1278 = vmatprep.subr.bf16.mxu0 %v1116
    %1279 = vmatpush1.bf16.msra.mxu0 %v1115
    %1280 = vmatprep.subr.bf16.mxu0 %v1124
    %1281 = vmatpush1.bf16.msra.mxu0 %v1123
    %1282 = vmatprep.subr.bf16.mxu0 %v1132
    %1283 = vmatpush1.bf16.msra.mxu0 %v1131
    %1284 = vmatprep.subr.bf16.mxu0 %v1140
    %1285 = vmatpush1.bf16.msra.mxu0 %v1139
    %1286 = vmatprep.subr.bf16.mxu0 %v1148
    %1287 = vmatpush1.bf16.msra.mxu0 %v1147
    %1288 = vmatprep.subr.bf16.mxu0 %v1156
    %1289 = vmatpush1.bf16.msra.mxu0 %v1155
    %1290 = vmatprep.subr.bf16.mxu0 %v1164
    %1291 = vmatpush1.bf16.msra.mxu0 %v1163
    %1292 = vmatprep.subr.bf16.mxu0 0
    %1293 = vmatpush1.bf16.msra.mxu0 0
    %1294 = vmatprep.subr.bf16.mxu0 0
    %1295 = vmatpush1.bf16.msra.mxu0 0
    %1296 = vmatprep.subr.bf16.mxu0 0
    %1297 = vmatpush1.bf16.msra.mxu0 0
    %1298 = vmatprep.subr.bf16.mxu0 0
    %1299 = vmatpush1.bf16.msra.mxu0 0
    %1300 = vmatprep.subr.bf16.mxu0 0
    %1301 = vmatpush1.bf16.msra.mxu0 0
    %1302 = vmatprep.subr.bf16.mxu0 0
    %1303 = vmatpush1.bf16.msra.mxu0 0
    %1304 = vmatprep.subr.bf16.mxu0 0
    %1305 = vmatpush1.bf16.msra.mxu0 0
    %1306 = vmatprep.subr.bf16.mxu0 0
    %1307 = vmatpush1.bf16.msra.mxu0 0
    %1308 = vmatprep.mubr.bf16.mxu0 0
    %1309 = vmatmul.mubr.bf16.gmra.mrb[0].mxu0 %v806
    %v1310 = vpop.f32.mrb[0].mxu0
    %v1311 = vadd.f32 %v884, %v1310
    %v1312 = vpop.f32.mrb[0].mxu0
    %v1313 = vadd.f32 %v888, %v1312
    %v1314 = vpop.f32.mrb[0].mxu0
    %v1315 = vadd.f32 %v884, %v1314
    %v1316 = vpop.f32.mrb[0].mxu0
    %v1317 = vadd.f32 %v888, %v1316
    %1318 = vdwg.mxu0
    %1319 = vmatprep.subr.bf16.mxu0 %v1110
    %1320 = vmatpush1.bf16.msra.mxu0 %v1109
    %1321 = vmatprep.subr.bf16.mxu0 %v1118
    %1322 = vmatpush1.bf16.msra.mxu0 %v1117
    %1323 = vmatprep.subr.bf16.mxu0 %v1126
    %1324 = vmatpush1.bf16.msra.mxu0 %v1125
    %1325 = vmatprep.subr.bf16.mxu0 %v1134
    %1326 = vmatpush1.bf16.msra.mxu0 %v1133
    %1327 = vmatprep.subr.bf16.mxu0 %v1142
    %1328 = vmatpush1.bf16.msra.mxu0 %v1141
    %1329 = vmatprep.subr.bf16.mxu0 %v1150
    %1330 = vmatpush1.bf16.msra.mxu0 %v1149
    %1331 = vmatprep.subr.bf16.mxu0 %v1158
    %1332 = vmatpush1.bf16.msra.mxu0 %v1157
    %1333 = vmatprep.subr.bf16.mxu0 %v1166
    %1334 = vmatpush1.bf16.msra.mxu0 %v1165
    %1335 = vmatprep.subr.bf16.mxu0 0
    %1336 = vmatpush1.bf16.msra.mxu0 0
    %1337 = vmatprep.subr.bf16.mxu0 0
    %1338 = vmatpush1.bf16.msra.mxu0 0
    %1339 = vmatprep.subr.bf16.mxu0 0
    %1340 = vmatpush1.bf16.msra.mxu0 0
    %1341 = vmatprep.subr.bf16.mxu0 0
    %1342 = vmatpush1.bf16.msra.mxu0 0
    %1343 = vmatprep.subr.bf16.mxu0 0
    %1344 = vmatpush1.bf16.msra.mxu0 0
    %1345 = vmatprep.subr.bf16.mxu0 0
    %1346 = vmatpush1.bf16.msra.mxu0 0
    %1347 = vmatprep.subr.bf16.mxu0 0
    %1348 = vmatpush1.bf16.msra.mxu0 0
    %1349 = vmatprep.subr.bf16.mxu0 0
    %1350 = vmatpush1.bf16.msra.mxu0 0
    %1351 = vmatprep.mubr.bf16.mxu0 0
    %1352 = vmatmul.mubr.bf16.gmra.mrb[0].mxu0 %v806
    %v1353 = vpop.f32.mrb[0].mxu0
    %v1354 = vadd.f32 %v892, %v1353
    %v1355 = vpop.f32.mrb[0].mxu0
    %v1356 = vadd.f32 %v896, %v1355
    %v1357 = vpop.f32.mrb[0].mxu0
    %v1358 = vadd.f32 %v892, %v1357
    %v1359 = vpop.f32.mrb[0].mxu0
    %v1360 = vadd.f32 %v896, %v1359
    %1361 = vdwg.mxu0
    %1362 = vmatprep.subr.bf16.mxu0 %v1112
    %1363 = vmatpush1.bf16.msra.mxu0 %v1111
    %1364 = vmatprep.subr.bf16.mxu0 %v1120
    %1365 = vmatpush1.bf16.msra.mxu0 %v1119
    %1366 = vmatprep.subr.bf16.mxu0 %v1128
    %1367 = vmatpush1.bf16.msra.mxu0 %v1127
    %1368 = vmatprep.subr.bf16.mxu0 %v1136
    %1369 = vmatpush1.bf16.msra.mxu0 %v1135
    %1370 = vmatprep.subr.bf16.mxu0 %v1144
    %1371 = vmatpush1.bf16.msra.mxu0 %v1143
    %1372 = vmatprep.subr.bf16.mxu0 %v1152
    %1373 = vmatpush1.bf16.msra.mxu0 %v1151
    %1374 = vmatprep.subr.bf16.mxu0 %v1160
    %1375 = vmatpush1.bf16.msra.mxu0 %v1159
    %1376 = vmatprep.subr.bf16.mxu0 %v1168
    %1377 = vmatpush1.bf16.msra.mxu0 %v1167
    %1378 = vmatprep.subr.bf16.mxu0 0
    %1379 = vmatpush1.bf16.msra.mxu0 0
    %1380 = vmatprep.subr.bf16.mxu0 0
    %1381 = vmatpush1.bf16.msra.mxu0 0
    %1382 = vmatprep.subr.bf16.mxu0 0
    %1383 = vmatpush1.bf16.msra.mxu0 0
    %1384 = vmatprep.subr.bf16.mxu0 0
    %1385 = vmatpush1.bf16.msra.mxu0 0
    %1386 = vmatprep.subr.bf16.mxu0 0
    %1387 = vmatpush1.bf16.msra.mxu0 0
    %1388 = vmatprep.subr.bf16.mxu0 0
    %1389 = vmatpush1.bf16.msra.mxu0 0
    %1390 = vmatprep.subr.bf16.mxu0 0
    %1391 = vmatpush1.bf16.msra.mxu0 0
    %1392 = vmatprep.subr.bf16.mxu0 0
    %1393 = vmatpush1.bf16.msra.mxu0 0
    %1394 = vmatprep.mubr.bf16.mxu0 0
    %1395 = vmatmul.mubr.bf16.gmra.mrb[0].mxu0 %v806
    %v1396 = vpop.f32.mrb[0].mxu0
    %v1397 = vadd.f32 %v900, %v1396
    %v1398 = vpop.f32.mrb[0].mxu0
    %v1399 = vadd.f32 %v904, %v1398
    %v1400 = vpop.f32.mrb[0].mxu0
    %v1401 = vadd.f32 %v900, %v1400
    %v1402 = vpop.f32.mrb[0].mxu0
    %v1403 = vadd.f32 %v904, %v1402
    %1404 = vdwg.mxu0
    %1405 = vst [vmem:[#allocation8] sm:$0xff] %v1268
    %1406 = vst [vmem:[#allocation8 + $0x8] sm:$0xff] %v1270
    %1407 = vst [vmem:[#allocation8 + $0x10] sm:$0xff] %v1311
    %1408 = vst [vmem:[#allocation8 + $0x18] sm:$0xff] %v1313
    %1409 = vst [vmem:[#allocation8 + $0x20] sm:$0xff] %v1354
    %1410 = vst [vmem:[#allocation8 + $0x28] sm:$0xff] %v1356
    %1411 = vst [vmem:[#allocation8 + $0x30] sm:$0xff] %v1397
    %1412 = vst [vmem:[#allocation8 + $0x38] sm:$0xff] %v1399
    %1413 = vst [vmem:[#allocation8 + $0x40] sm:$0xff] %v1272
    %1414 = vst [vmem:[#allocation8 + $0x48] sm:$0xff] %v1274
    %1415 = vst [vmem:[#allocation8 + $0x50] sm:$0xff] %v1315
    %1416 = vst [vmem:[#allocation8 + $0x58] sm:$0xff] %v1317
    %1417 = vst [vmem:[#allocation8 + $0x60] sm:$0xff] %v1358
    %1418 = vst [vmem:[#allocation8 + $0x68] sm:$0xff] %v1360
    %1419 = vst [vmem:[#allocation8 + $0x70] sm:$0xff] %v1401
    %1420 = vst [vmem:[#allocation8 + $0x78] sm:$0xff] %v1403
    %1421 = vst [vmem:[#allocation9] sm:$0xff] %v798
    %1422 = vst [vmem:[#allocation9 + $0x8] sm:$0xff] %v799
    %1423 = vst [vmem:[#allocation11] sm:$0xff] %v804
    %1424 = vst [vmem:[#allocation11 + $0x8] sm:$0xff] %v805
    // Predicated region
    $region34: #{tpu_custom_call.1} parent=1 // pred_check
      _
    $region35: #{tpu_custom_call.1} parent=1 // pred_check_branch
      %1426 = sbr.rel (0) target = $region37
    $region36: #{tpu_custom_call.1} parent=1 // pred_region
      %s1428 = ssub.s32 2048, 2048
      %1429 = vsyncadd [#allocation4], %s1428
      %s1430 = sshll.u32 [#allocation8], 4
      %s1431 = int_to_ptr.vmem [resolvable:$true] %s1430
      %1436 = dma.vmem_to_hbm [thread:$0]  %s1431, 2048, %s5, [#allocation4], 1024, 1024, 64
    $region37: #{tpu_custom_call.1} parent=1 // pred_fallthru
      _
    // Predicated region
    $region38: #{tpu_custom_call.1} parent=1 // pred_check
      _
    $region39: #{tpu_custom_call.1} parent=1 // pred_check_branch
      %1438 = sbr.rel (0) target = $region41
    $region40: #{tpu_custom_call.1} parent=1 // pred_region
      %s1440 = ssub.s32 256, 256
      %1441 = vsyncadd [#allocation10], %s1440
      %s1442 = sshll.u32 [#allocation9], 4
      %s1443 = int_to_ptr.vmem [resolvable:$true] %s1442
      %1448 = dma.vmem_to_hbm [thread:$0]  %s1443, 256, %s6, [#allocation10], 128, 128, 8
    $region41: #{tpu_custom_call.1} parent=1 // pred_fallthru
      _
    // Predicated region
    $region42: #{tpu_custom_call.1} parent=1 // pred_check
      _
    $region43: #{tpu_custom_call.1} parent=1 // pred_check_branch
      %1450 = sbr.rel (0) target = $region45
    $region44: #{tpu_custom_call.1} parent=1 // pred_region
      %s1452 = ssub.s32 256, 256
      %1453 = vsyncadd [#allocation10], %s1452
      %s1454 = sshll.u32 [#allocation11], 4
      %s1455 = int_to_ptr.vmem [resolvable:$true] %s1454
      %1460 = dma.vmem_to_hbm [thread:$0]  %s1455, 256, %s7, [#allocation10], 128, 128, 8
    $region45: #{tpu_custom_call.1} parent=1 // pred_fallthru
      _
    // Predicated region
    $region46: #{tpu_custom_call.1} parent=1 // pred_check
      _
    $region47: #{tpu_custom_call.1} parent=1 // pred_check_branch
      %1462 = sbr.rel (0) target = $region49
    $region48: #{tpu_custom_call.1} parent=1 // pred_region
      %1463 = dma.done [#allocation4], 2048
    $region49: #{tpu_custom_call.1} parent=1 // pred_fallthru
      _
    // Predicated region
    $region50: #{tpu_custom_call.1} parent=1 // pred_check
      _
    $region51: #{tpu_custom_call.1} parent=1 // pred_check_branch
      %1465 = sbr.rel (0) target = $region53
    $region52: #{tpu_custom_call.1} parent=1 // pred_region
      %1466 = dma.done [#allocation10], 256
    $region53: #{tpu_custom_call.1} parent=1 // pred_fallthru
      _
    // Predicated region
    $region54: #{tpu_custom_call.1} parent=1 // pred_check
      _
    $region55: #{tpu_custom_call.1} parent=1 // pred_check_branch
      %1468 = sbr.rel (0) target = $region57
    $region56: #{tpu_custom_call.1} parent=1 // pred_region
      %1469 = dma.done [#allocation10], 256
    $region57: #{tpu_custom_call.1} parent=1 // pred_fallthru
      _
    %1470 = vsyncpa [#allocation3], 1
    %1471 = vsyncpa [#allocation6], 1
    %1472 = vsyncpa [#allocation4], 1
    %1473 = vsyncpa [#allocation10], 1

</llo_original>
